<compile_context>
chip_gen: v7x
topology: tpu7x:2x2x1
jax: 0.10.0
libtpu: 0.0.40
codegen_flags: <defaults>
</compile_context>

<pallas_src>
import functools

import jax
import jax.numpy as jnp
from jax.experimental import pallas as pl
from jax.experimental.pallas import tpu as pltpu

_LANE = 128
_SUBLANE = 8


def _round_up(n, m):
    return ((n + m - 1) // m) * m


def _diag_gaussian_kernel(x_ref, w_ref, b_ref, out_ref):
    """One fused head: out = x @ W_fused + b_fused (f32 MXU accumulation).

    x_ref:   (TB, D)      batch tile
    w_ref:   (D, Cpad)    fused, lane-padded weights (VMEM-resident)
    b_ref:   (1, Cpad)    fused, lane-padded bias row
    out_ref: (TB, Cpad)   lane-dense output slab
    """
    acc = jnp.dot(x_ref[...], w_ref[...], preferred_element_type=jnp.float32)
    out_ref[...] = (acc + b_ref[...]).astype(out_ref.dtype)


def prepare_params(w_mean, b_mean, w_log_var, b_log_var):
    """One-time parameter preparation (NOT in the per-call hot path).

    Fuses the two nn.Linear heads into a single (D, Cpad) weight and
    (1, Cpad) bias, with the output (lane) dim zero-padded to a multiple of
    128 so the kernel's stores are lane-dense / unmasked.
    Returns (w_fused, b_fused, nb_components).
    """
    C, D = w_mean.shape
    c2 = 2 * C
    c_pad = _round_up(c2, _LANE)
    w_fused = jnp.concatenate([w_mean.T, w_log_var.T], axis=1)       # (D, 2C)
    b_fused = jnp.concatenate([b_mean, b_log_var]).reshape(1, c2)    # (1, 2C)
    if c_pad != c2:
        w_fused = jnp.pad(w_fused, ((0, 0), (0, c_pad - c2)))
        b_fused = jnp.pad(b_fused, ((0, 0), (0, c_pad - c2)))
    return w_fused, b_fused, C


@functools.partial(jax.jit, static_argnames=("nb_components", "block_b"))
def diagonal_gaussian(x, w_fused, b_fused, *, nb_components, block_b=512):
    """Fused forward pass. Returns (mean, log_var), each (B, nb_components)."""
    B, D = x.shape
    c_pad = w_fused.shape[1]

    # Batch tile: multiple of 8 sublanes, capped at block_b rows.
    tb = max(_SUBLANE, min(_round_up(B, _SUBLANE), block_b))
    b_pad = _round_up(B, tb)
    if b_pad != B:
        x = jnp.pad(x, ((0, b_pad - B), (0, 0)))

    grid = (b_pad // tb,)

    # Explicit VMEM budget: double-buffered x / out tiles + resident weights.
    itemsize = jnp.dtype(x.dtype).itemsize
    w_itemsize = jnp.dtype(w_fused.dtype).itemsize
    vmem_bytes = (
        2 * (tb * D + tb * c_pad) * itemsize          # pipelined x / out buffers
        + (D * c_pad + c_pad) * w_itemsize            # resident fused weights/bias
    )
    vmem_limit = int(min(64 << 20, max(2 * vmem_bytes + (4 << 20), 16 << 20)))

    out = pl.pallas_call(
        _diag_gaussian_kernel,
        out_shape=jax.ShapeDtypeStruct((b_pad, c_pad), x.dtype),
        grid=grid,
        in_specs=[
            pl.BlockSpec((tb, D), lambda i: (i, 0)),      # x: tiled over batch
            pl.BlockSpec((D, c_pad), lambda i: (0, 0)),   # fused weights (resident)
            pl.BlockSpec((1, c_pad), lambda i: (0, 0)),   # fused bias (resident)
        ],
        out_specs=pl.BlockSpec((tb, c_pad), lambda i: (i, 0)),
        compiler_params=pltpu.CompilerParams(
            dimension_semantics=("parallel",),
            vmem_limit_bytes=vmem_limit,
        ),
    )(x, w_fused, b_fused)

    C = nb_components
    mean = out[:B, :C]
    log_var = out[:B, C:2 * C]
    return mean, log_var


def init_params(key, input_size, nb_components, dtype=jnp.float32):
    """Deterministic nn.Linear-style init: U(-1/sqrt(fan_in), 1/sqrt(fan_in))."""
    k1, k2, k3, k4 = jax.random.split(key, 4)
    bound = 1.0 / (input_size ** 0.5)
    w_mean = jax.random.uniform(k1, (nb_components, input_size), dtype,
                                minval=-bound, maxval=bound)
    b_mean = jax.random.uniform(k2, (nb_components,), dtype,
                                minval=-bound, maxval=bound)
    w_log_var = jax.random.uniform(k3, (nb_components, input_size), dtype,
                                   minval=-bound, maxval=bound)
    b_log_var = jax.random.uniform(k4, (nb_components,), dtype,
                                   minval=-bound, maxval=bound)
    return w_mean, b_mean, w_log_var, b_log_var


if __name__ == "__main__":
    batch = 8
    input_size = 32
    nb_components = 16

    key = jax.random.PRNGKey(0)
    kx, kp = jax.random.split(key)
    x = jax.random.normal(kx, (batch, input_size), dtype=jnp.float32)
    w_mean, b_mean, w_log_var, b_log_var = init_params(kp, input_size, nb_components)

    # One-time param prep (transpose + fuse + lane-pad), outside the hot path.
    w_fused, b_fused, _ = prepare_params(w_mean, b_mean, w_log_var, b_log_var)
    w_fused, b_fused = jax.block_until_ready((w_fused, b_fused))

    mean, log_var = diagonal_gaussian(x, w_fused, b_fused,
                                      nb_components=nb_components)
    jax.block_until_ready((mean, log_var))

    # Reference check in plain JAX (same math as torch's nn.Linear).
    mean_ref = x @ w_mean.T + b_mean
    logvar_ref = x @ w_log_var.T + b_log_var
    assert mean.shape == (batch, nb_components)
    assert log_var.shape == (batch, nb_components)
    assert jnp.allclose(mean, mean_ref, atol=1e-5, rtol=1e-5)
    assert jnp.allclose(log_var, logvar_ref, atol=1e-5, rtol=1e-5)

    print("KERNEL_OK")
</pallas_src>

<mosaic_0001>
module attributes {stable_mosaic.version = 11 : i64} {
  func.func @_diag_gaussian_kernel(%arg0: i32, %arg1: memref<8x32xf32, #tpu.memory_space<vmem>>, %arg2: memref<32x128xf32, #tpu.memory_space<vmem>>, %arg3: memref<1x128xf32, #tpu.memory_space<vmem>>, %arg4: memref<8x128xf32, #tpu.memory_space<vmem>>) attributes {dimension_semantics = [#tpu.dimension_semantics<parallel>], iteration_bounds = array<i64: 1>, scalar_prefetch = 0 : i64, scratch_operands = 0 : i64, tpu.core_type = #tpu.core_type<tc>, window_params = [{transform_indices = @transform_0, window_bounds = array<i64: 8, 32>}, {pipeline_mode = #tpu.pipeline_mode<synchronous>, transform_indices = @transform_1, window_bounds = array<i64: 32, 128>}, {pipeline_mode = #tpu.pipeline_mode<synchronous>, transform_indices = @transform_2, window_bounds = array<i64: 1, 128>}, {transform_indices = @transform_3, window_bounds = array<i64: 8, 128>}]} {
    %c0 = arith.constant 0 : index
    %c0_0 = arith.constant 0 : index
    %0 = vector.load %arg1[%c0, %c0_0] : memref<8x32xf32, #tpu.memory_space<vmem>>, vector<8x32xf32>
    %c0_1 = arith.constant 0 : index
    %c0_2 = arith.constant 0 : index
    %1 = vector.load %arg2[%c0_1, %c0_2] : memref<32x128xf32, #tpu.memory_space<vmem>>, vector<32x128xf32>
    %cst = arith.constant dense<0.000000e+00> : vector<8x128xf32>
    %2 = tpu.matmul %0, %1, %cst {dimension_numbers = #tpu.dot_dimension_numbers<[1], [0], [0], [1], [0, 0, 1, 1], [], []>} : vector<8x32xf32>, vector<32x128xf32>, vector<8x128xf32> -> vector<8x128xf32>
    %c0_3 = arith.constant 0 : index
    %c0_4 = arith.constant 0 : index
    %3 = vector.load %arg3[%c0_3, %c0_4] : memref<1x128xf32, #tpu.memory_space<vmem>>, vector<1x128xf32>
    %4 = vector.broadcast %3 : vector<1x128xf32> to vector<8x128xf32>
    %5 = arith.addf %2, %4 : vector<8x128xf32>
    %c0_5 = arith.constant 0 : index
    %c0_6 = arith.constant 0 : index
    %6 = vector.load %arg4[%c0_5, %c0_6] : memref<8x128xf32, #tpu.memory_space<vmem>>, vector<8x128xf32>
    tpu.vector_store %arg4[%c0_5, %c0_6], %5 {strides = array<i32>} : memref<8x128xf32, #tpu.memory_space<vmem>>, vector<8x128xf32>,
    return
  }
  func.func @transform_0(%arg0: i32) -> (i32, i32) {
    %c0_i32 = arith.constant 0 : i32
    %c0_i32_0 = arith.constant 0 : i32
    return %arg0, %c0_i32 : i32, i32
  }
  func.func @transform_1(%arg0: i32) -> (i32, i32) {
    %c0_i32 = arith.constant 0 : i32
    %c0_i32_0 = arith.constant 0 : i32
    %c0_i32_1 = arith.constant 0 : i32
    return %c0_i32, %c0_i32_0 : i32, i32
  }
  func.func @transform_2(%arg0: i32) -> (i32, i32) {
    %c0_i32 = arith.constant 0 : i32
    %c0_i32_0 = arith.constant 0 : i32
    %c0_i32_1 = arith.constant 0 : i32
    return %c0_i32, %c0_i32_0 : i32, i32
  }
  func.func @transform_3(%arg0: i32) -> (i32, i32) {
    %c0_i32 = arith.constant 0 : i32
    %c0_i32_0 = arith.constant 0 : i32
    return %arg0, %c0_i32 : i32, i32
  }
}

</mosaic_0001>

<llo_original>
// kernel: diagonal_gaussian.1
$region0: #{diagonal_gaussian.1}
  #allocation0 [shape = 'u32[]', space=smem, size = 0x4, offset = 0x4, fixed_abs, tag = 'smem constant byte address 0x4 - core index']
  #allocation1 [shape = 'u32[144,128]{1,0:T(1,128)}', space=vmem, size = 0x12000, scoped, tag = 'internal scratch']
  %s0 = inlined_call_operand.hbm [shape: f32[8,32], index: 0, kind: input, shape index: {}]
  %s1 = inlined_call_operand.hbm [shape: f32[32,128], index: 1, kind: input, shape index: {}]
  %s2 = inlined_call_operand.vmem [shape: f32[1,128], index: 2, kind: input, shape index: {}]
  %s3 = inlined_call_operand.vmem [shape: f32[8,128], index: 3, kind: output, shape index: {}]
  %s4 = sld [smem:[#allocation0]]
  $region30: #{diagonal_gaussian.1} parent=0
    _
  %s6 = ssub.s32 1, %s4
  %s7 = scalar_select 0, %s6, %s4
  $region1: #{diagonal_gaussian.1} parent=0
    #allocation2 [shape = 'u8[4096]{0}', space=vmem, size = 0x1000, scoped, tag = 'input window, operand 0, single buffered']
    #allocation3 [shape = 's32[1]{0}', space=sflag, size = 0x4, scoped, tag = 'scoped memory for diagonal_gaussian.1']
    #allocation4 [shape = 'u8[16384]{0}', space=vmem, size = 0x4000, scoped, tag = 'input window, operand 1, single buffered']
    #allocation5 [shape = 's32[1]{0}', space=sflag, size = 0x4, scoped, tag = 'scoped memory for diagonal_gaussian.1']
    %8 = vsyncpa [#allocation3], 0
    %9 = vsyncpa [#allocation5], 0
    // Predicated region
    $region2: #{diagonal_gaussian.1} parent=1 // pred_check
      _
    $region3: #{diagonal_gaussian.1} parent=1 // pred_check_branch
      %11 = sbr.rel (0) target = $region5
    $region4: #{diagonal_gaussian.1} parent=1 // pred_region
      %s13 = ssub.s32 128, 128
      %14 = vsyncadd [#allocation3], %s13
      %s16 = sshll.u32 [#allocation2], 4
      %s17 = int_to_ptr.vmem [resolvable:$true] %s16
      %19 = dma.hbm_to_vmem [thread:$0]  %s0, 128, %s17, [#allocation3]
    $region5: #{diagonal_gaussian.1} parent=1 // pred_fallthru
      _
    // Predicated region
    $region6: #{diagonal_gaussian.1} parent=1 // pred_check
      _
    $region7: #{diagonal_gaussian.1} parent=1 // pred_check_branch
      %21 = sbr.rel (0) target = $region9
    $region8: #{diagonal_gaussian.1} parent=1 // pred_region
      %s23 = ssub.s32 512, 512
      %24 = vsyncadd [#allocation5], %s23
      %s25 = sshll.u32 [#allocation4], 4
      %s26 = int_to_ptr.vmem [resolvable:$true] %s25
      %31 = dma.hbm_to_vmem [thread:$0]  %s1, 512, %s26, [#allocation5], 128, 128, 8
    $region9: #{diagonal_gaussian.1} parent=1 // pred_fallthru
      _
    // Predicated region
    $region10: #{diagonal_gaussian.1} parent=1 // pred_check
      _
    $region11: #{diagonal_gaussian.1} parent=1 // pred_check_branch
      %33 = sbr.rel (0) target = $region13
    $region12: #{diagonal_gaussian.1} parent=1 // pred_region
      _
    $region13: #{diagonal_gaussian.1} parent=1 // pred_fallthru
      _
    // Predicated region
    $region14: #{diagonal_gaussian.1} parent=1 // pred_check
      _
    $region15: #{diagonal_gaussian.1} parent=1 // pred_check_branch
      %35 = sbr.rel (0) target = $region17
    $region16: #{diagonal_gaussian.1} parent=1 // pred_region
      %36 = dma.done [#allocation3], 128
    $region17: #{diagonal_gaussian.1} parent=1 // pred_fallthru
      _
    // Predicated region
    $region18: #{diagonal_gaussian.1} parent=1 // pred_check
      _
    $region19: #{diagonal_gaussian.1} parent=1 // pred_check_branch
      %38 = sbr.rel (0) target = $region21
    $region20: #{diagonal_gaussian.1} parent=1 // pred_region
      %39 = dma.done [#allocation5], 512
    $region21: #{diagonal_gaussian.1} parent=1 // pred_fallthru
      _
    %v40 = vld [vmem:[#allocation2] sm:$0xff]
    %v41 = vld [vmem:[#allocation4] sm:$0xff]
    %v42 = vld [vmem:[#allocation4 + $0x8] sm:$0xff]
    %v43 = vld [vmem:[#allocation4 + $0x10] sm:$0xff]
    %v44 = vld [vmem:[#allocation4 + $0x18] sm:$0xff]
    %v45 = vld [vmem:[%s2] sm:$0x1]
    %v47 = vlaneseq
    %v48 = vshrl.u32 %v47, 7
    %v49 = vsub.s32 0, %v48
    %v50 = vrot.slane %v45, %v49
    %vm52 = vcmask 261120
    %v54 = vsel %vm52, %v40, 0
    %56 = vmatprep.subr.mxu0 0.0
    %57 = vmatpush1.msra.mxu0 %v41
    %58 = vmatprep.subr.mxu0 0.0
    %59 = vmatpush1.msra.mxu0 %v42
    %60 = vmatprep.subr.mxu0 0.0
    %61 = vmatpush1.msra.mxu0 %v43
    %62 = vmatprep.subr.mxu0 0.0
    %63 = vmatpush1.msra.mxu0 %v44
    %64 = vmatprep.subr.mxu0 0.0
    %65 = vmatpush1.msra.mxu0 0.0
    %66 = vmatprep.subr.mxu0 0.0
    %67 = vmatpush1.msra.mxu0 0.0
    %68 = vmatprep.subr.mxu0 0.0
    %69 = vmatpush1.msra.mxu0 0.0
    %70 = vmatprep.subr.mxu0 0.0
    %71 = vmatpush1.msra.mxu0 0.0
    %72 = vmatprep.subr.mxu0 0.0
    %73 = vmatpush1.msra.mxu0 0.0
    %74 = vmatprep.subr.mxu0 0.0
    %75 = vmatpush1.msra.mxu0 0.0
    %76 = vmatprep.subr.mxu0 0.0
    %77 = vmatpush1.msra.mxu0 0.0
    %78 = vmatprep.subr.mxu0 0.0
    %79 = vmatpush1.msra.mxu0 0.0
    %80 = vmatprep.subr.mxu0 0.0
    %81 = vmatpush1.msra.mxu0 0.0
    %82 = vmatprep.subr.mxu0 0.0
    %83 = vmatpush1.msra.mxu0 0.0
    %84 = vmatprep.subr.mxu0 0.0
    %85 = vmatpush1.msra.mxu0 0.0
    %86 = vmatprep.subr.mxu0 0.0
    %87 = vmatpush1.msra.mxu0 0.0
    %88 = vmatprep.subr.mxu0 0.0
    %89 = vmatpush1.msra.mxu0 0.0
    %90 = vmatprep.subr.mxu0 0.0
    %91 = vmatpush1.msra.mxu0 0.0
    %92 = vmatprep.subr.mxu0 0.0
    %93 = vmatpush1.msra.mxu0 0.0
    %94 = vmatprep.subr.mxu0 0.0
    %95 = vmatpush1.msra.mxu0 0.0
    %96 = vmatprep.subr.mxu0 0.0
    %97 = vmatpush1.msra.mxu0 0.0
    %98 = vmatprep.subr.mxu0 0.0
    %99 = vmatpush1.msra.mxu0 0.0
    %100 = vmatprep.subr.mxu0 0.0
    %101 = vmatpush1.msra.mxu0 0.0
    %102 = vmatprep.subr.mxu0 0.0
    %103 = vmatpush1.msra.mxu0 0.0
    %104 = vmatprep.subr.mxu0 0.0
    %105 = vmatpush1.msra.mxu0 0.0
    %106 = vmatprep.subr.mxu0 0.0
    %107 = vmatpush1.msra.mxu0 0.0
    %108 = vmatprep.subr.mxu0 0.0
    %109 = vmatpush1.msra.mxu0 0.0
    %110 = vmatprep.subr.mxu0 0.0
    %111 = vmatpush1.msra.mxu0 0.0
    %112 = vmatprep.subr.mxu0 0.0
    %113 = vmatpush1.msra.mxu0 0.0
    %114 = vmatprep.subr.mxu0 0.0
    %115 = vmatpush1.msra.mxu0 0.0
    %116 = vmatprep.subr.mxu0 0.0
    %117 = vmatpush1.msra.mxu0 0.0
    %118 = vmatprep.subr.mxu0 0.0
    %119 = vmatpush1.msra.mxu0 0.0
    %120 = vmatprep.mubr.f32.mxu0 0.0
    %121 = vmatmul.mubr.f32.gmra.mrb[0].mxu0 %v54
    %v122 = vpop.f32.mrb[0].mxu0
    %v123 = vadd.f32 %v50, %v122
    %v124 = vpop.f32.mrb[0].mxu0
    %125 = vdwg.mxu0
    %126 = vst [vmem:[%s3] sm:$0xff] %v123
    // Predicated region
    $region22: #{diagonal_gaussian.1} parent=1 // pred_check
      _
    $region23: #{diagonal_gaussian.1} parent=1 // pred_check_branch
      %128 = sbr.rel (0) target = $region25
    $region24: #{diagonal_gaussian.1} parent=1 // pred_region
      _
    $region25: #{diagonal_gaussian.1} parent=1 // pred_fallthru
      _
    // Predicated region
    $region26: #{diagonal_gaussian.1} parent=1 // pred_check
      _
    $region27: #{diagonal_gaussian.1} parent=1 // pred_check_branch
      %130 = sbr.rel (0) target = $region29
    $region28: #{diagonal_gaussian.1} parent=1 // pred_region
      _
    $region29: #{diagonal_gaussian.1} parent=1 // pred_fallthru
      _
    %131 = vsyncpa [#allocation3], 1
    %132 = vsyncpa [#allocation5], 1

</llo_original>
